<compile_context>
chip_gen: v5e
topology: v5e:2x2
jax: 0.10.0
libtpu: 0.0.40
codegen_flags: <defaults>
</compile_context>

<pallas_src>
import numpy as np
import jax
import jax.numpy as jnp
from jax.experimental import pallas as pl
from jax.experimental.pallas import tpu as pltpu


# ----------------------------------------------------------------------------
# Parameter setup glue (plain JAX): product of Householder reflections.
# ----------------------------------------------------------------------------
def fast_hmm(v, eps=1e-12):
    """v: (..., n_matrices, S) -> product of Householder matrices, shape (..., S, S)."""
    *batch, n_mat, s = v.shape
    h = jnp.broadcast_to(jnp.eye(s, dtype=v.dtype), (*batch, s, s))
    for m in range(n_mat):
        u = v[..., m, :]
        # eps guard against a zero row producing NaNs
        u = u * jax.lax.rsqrt(jnp.maximum(jnp.sum(u * u, axis=-1, keepdims=True), eps))
        hu = jnp.einsum("...ij,...j->...i", h, u)                 # H @ u
        h = h - 2.0 * hu[..., :, None] * u[..., None, :]          # H @ (I - 2 u u^T)
    return h


def _pick_block_count(n, unit_bytes, target_bytes=4 << 20):
    """Largest divisor d of n with d*unit_bytes <= target, preferring >= 2 grid steps."""
    divisors = [d for d in range(1, n + 1) if n % d == 0]
    fitting = [d for d in divisors if d * unit_bytes <= target_bytes] or [1]
    multi_step = [d for d in fitting if n // d >= 2]
    return max(multi_step) if multi_step else max(fitting)


# ----------------------------------------------------------------------------
# Pallas kernel: one block of G Householder matrices applied to their vectors.
# ----------------------------------------------------------------------------
def _hh_block_kernel(h_ref, x_ref, o_ref):
    # h_ref: (G, S, S)   G Householder-product matrices (one coarse block)
    # x_ref: (G, 1, S)   matching input vectors (VMEM-resident on the fast path)
    # o_ref: (G, 1, S)   f32 output, lane-dense (last dim = S)
    y = jax.lax.dot_general(
        x_ref[...], h_ref[...],
        dimension_numbers=(((2,), (2,)), ((0,), (0,))),   # y[g,0,a] = sum_b x[g,0,b] * h[g,a,b]
        preferred_element_type=jnp.float32,
    )
    o_ref[...] = y.astype(o_ref.dtype)


def householder_apply(h_flat, x_blk, block_size, x_resident):
    """h_flat: (B, S, S) bf16.
    x_blk:  (G, 1, S) if x_resident (x rows for one block, valid for every block because each
            block start is a multiple of n_out), else (B, 1, S) streamed with H.
    Returns (B, 1, S) float32."""
    b, s, _ = h_flat.shape
    assert b % block_size == 0
    n_steps = b // block_size
    itemsize = jnp.dtype(h_flat.dtype).itemsize

    x_index_map = (lambda i: (0, 0, 0)) if x_resident else (lambda i: (i, 0, 0))

    # Double-buffered VMEM need (H block + x block + f32 out block).  Only raise the limit
    # when the smallest default scoped VMEM (v5e: 16 MiB) would not be enough.
    block_bytes = block_size * s * (s * itemsize + itemsize + 4)
    need = 2 * block_bytes + (1 << 20)
    cp_kwargs = dict(dimension_semantics=("parallel",))
    if need > (15 << 20):
        cp_kwargs["vmem_limit_bytes"] = int(min(need + (4 << 20), 48 << 20))

    cost = pl.CostEstimate(
        flops=2 * b * s * s,
        transcendentals=0,
        bytes_accessed=b * s * s * itemsize + int(x_blk.size) * itemsize + b * s * 4,
    )

    return pl.pallas_call(
        _hh_block_kernel,
        out_shape=jax.ShapeDtypeStruct((b, 1, s), jnp.float32),
        grid=(n_steps,),
        in_specs=[
            pl.BlockSpec((block_size, s, s), lambda i: (i, 0, 0)),
            # fast path: constant block index -> fetched once, stays resident across all steps
            pl.BlockSpec((block_size, 1, s), x_index_map),
        ],
        out_specs=pl.BlockSpec((block_size, 1, s), lambda i: (i, 0, 0)),
        compiler_params=pltpu.CompilerParams(**cp_kwargs),
        cost_estimate=cost,
    )(h_flat, x_blk)


# ----------------------------------------------------------------------------
# Module wrapper.
# ----------------------------------------------------------------------------
class HouseholderLayerPallas:
    def __init__(self, n_matrices, sample_size, n_in_features, n_out_features, n_hidden, key,
                 param_dtype=jnp.bfloat16):
        assert n_in_features == n_out_features, (
            "stacking the per-layer H's (list-of-matmul interpretation) requires "
            "n_in_features == n_out_features"
        )
        self.n_matrices = n_matrices
        self.sample_size = sample_size
        self.n_in_features = n_in_features
        self.n_out_features = n_out_features
        self.n_hidden = n_hidden

        keys = jax.random.split(key, n_hidden + 1)
        v = [jax.random.normal(keys[0],
                               (n_in_features, n_out_features, n_matrices, sample_size),
                               jnp.float32)]
        for i in range(n_hidden):
            v.append(jax.random.normal(keys[i + 1],
                                       (n_out_features, n_out_features, n_matrices, sample_size),
                                       jnp.float32))
        self.v = v
        # Build H in f32, store in bf16: the kernel is HBM-bound, so halving H bytes ~halves
        # wall-clock; MXU accumulates in f32.
        self.H = jnp.stack([fast_hmm(layer) for layer in self.v], axis=0).astype(param_dtype)

        # Grid coarsening: ~<= 4 MiB bf16 H block per step (measured roofline plateau; fits
        # default scoped VMEM double-buffered on v5e/v6e/v7x), >= 2 steps when possible.
        L, Fi, Fo, S, _ = self.H.shape
        itemsize = jnp.dtype(param_dtype).itemsize
        target = 4 << 20
        group_bytes = Fo * S * S * itemsize
        if group_bytes <= target:
            # Fast path: whole (l, i) groups per block -> every block start is a multiple of
            # Fo, so a single (G,1,S) x block with constant index_map serves all steps.
            n_groups = L * Fi
            gpb = _pick_block_count(n_groups, group_bytes, target)
            self._block_size = gpb * Fo
            self._x_resident = True
        else:
            # A single group of H is already bigger than the VMEM target (huge S / Fo):
            # tile the flat matrix axis directly and stream x with H (x is 1/S of H traffic).
            self._block_size = _pick_block_count(L * Fi * Fo, S * S * itemsize, target)
            self._x_resident = False

    def forward(self, x):
        # x: (S, F_out)   (features last)
        L, Fi, Fo, S, _ = self.H.shape
        xt = jnp.swapaxes(x, -1, -2).astype(self.H.dtype)   # torch x.transpose(-1,-2): (Fo, S)
        if self._x_resident:
            # One block's worth of input rows (local index g uses x column g % Fo); tiny,
            # resident in VMEM — no per-matrix broadcast of x through HBM, no per-step x DMA.
            reps = self._block_size // Fo
        else:
            reps = (L * Fi * Fo) // Fo
        x_blk = jnp.tile(xt, (reps, 1))[:, None, :]          # (G,1,S) or (B,1,S)
        h_flat = self.H.reshape(L * Fi * Fo, S, S)
        y = householder_apply(h_flat, x_blk, self._block_size, self._x_resident)  # (B,1,S) f32
        y = y.reshape(L, Fi, Fo, S)                           # matmul(...).squeeze(-1)
        # keep the kernel store lane-dense; do the tiny final transpose in XLA
        return jnp.swapaxes(y, -1, -2)                        # (L, Fi, S, Fo)

    def log_abs_det_jacobian(self, x, y):
        return jnp.asarray(0.0, dtype=jnp.float32)


# ----------------------------------------------------------------------------
# Demo / self-check.
# ----------------------------------------------------------------------------
if __name__ == "__main__":
    key = jax.random.PRNGKey(0)
    k_param, k_x = jax.random.split(key)

    n_matrices = 3
    sample_size = 128
    n_features = 4       # n_in_features == n_out_features
    n_hidden = 1         # -> n_layers = 2

    layer = HouseholderLayerPallas(
        n_matrices=n_matrices,
        sample_size=sample_size,
        n_in_features=n_features,
        n_out_features=n_features,
        n_hidden=n_hidden,
        key=k_param,
    )

    x = jax.random.normal(k_x, (sample_size, n_features), jnp.float32)

    y = jax.block_until_ready(layer.forward(x))

    # pure-JAX reference of the same semantics with the same (bf16-stored) parameters / cast
    h32 = layer.H.astype(jnp.float32)
    x32 = x.astype(layer.H.dtype).astype(jnp.float32)
    y_ref = jnp.einsum("lijab,bj->lija", h32, x32)       # H[l,i,j] @ x[:, j]
    y_ref = jnp.swapaxes(y_ref, -1, -2)

    assert y.shape == (n_hidden + 1, n_features, sample_size, n_features)
    np.testing.assert_allclose(np.asarray(y), np.asarray(y_ref), rtol=1e-2, atol=1e-2)

    print("KERNEL_OK")
</pallas_src>

<mosaic_0001>
module attributes {stable_mosaic.version = 11 : i64} {
  func.func @_hh_block_kernel(%arg0: i32, %arg1: memref<16x128x128xbf16, #tpu.memory_space<vmem>>, %arg2: memref<16x1x128xbf16, #tpu.memory_space<vmem>>, %arg3: memref<16x1x128xf32, #tpu.memory_space<vmem>>) attributes {dimension_semantics = [#tpu.dimension_semantics<parallel>], iteration_bounds = array<i64: 2>, scalar_prefetch = 0 : i64, scratch_operands = 0 : i64, tpu.core_type = #tpu.core_type<tc>, window_params = [{transform_indices = @transform_0, window_bounds = array<i64: 16, 128, 128>}, {pipeline_mode = #tpu.pipeline_mode<synchronous>, transform_indices = @transform_1, window_bounds = array<i64: 16, 1, 128>}, {transform_indices = @transform_2, window_bounds = array<i64: 16, 1, 128>}]} {
    %c0 = arith.constant 0 : index
    %c0_0 = arith.constant 0 : index
    %c0_1 = arith.constant 0 : index
    %0 = vector.load %arg2[%c0, %c0_0, %c0_1] : memref<16x1x128xbf16, #tpu.memory_space<vmem>>, vector<16x1x128xbf16>
    %c0_2 = arith.constant 0 : index
    %c0_3 = arith.constant 0 : index
    %c0_4 = arith.constant 0 : index
    %1 = vector.load %arg1[%c0_2, %c0_3, %c0_4] : memref<16x128x128xbf16, #tpu.memory_space<vmem>>, vector<16x128x128xbf16>
    %cst = arith.constant dense<0.000000e+00> : vector<16x1x128xf32>
    %2 = tpu.matmul %0, %1, %cst {dimension_numbers = #tpu.dot_dimension_numbers<[2], [2], [1], [1], [0, 0, 0, 1, 1, 1], [0], [0]>} : vector<16x1x128xbf16>, vector<16x128x128xbf16>, vector<16x1x128xf32> -> vector<16x1x128xf32>
    %c0_5 = arith.constant 0 : index
    %c0_6 = arith.constant 0 : index
    %c0_7 = arith.constant 0 : index
    %3 = vector.load %arg3[%c0_5, %c0_6, %c0_7] : memref<16x1x128xf32, #tpu.memory_space<vmem>>, vector<16x1x128xf32>
    tpu.vector_store %arg3[%c0_5, %c0_6, %c0_7], %2 {strides = array<i32>} : memref<16x1x128xf32, #tpu.memory_space<vmem>>, vector<16x1x128xf32>,
    return
  }
  func.func @transform_0(%arg0: i32) -> (i32, i32, i32) {
    %c0_i32 = arith.constant 0 : i32
    %c0_i32_0 = arith.constant 0 : i32
    %c0_i32_1 = arith.constant 0 : i32
    return %arg0, %c0_i32, %c0_i32_0 : i32, i32, i32
  }
  func.func @transform_1(%arg0: i32) -> (i32, i32, i32) {
    %c0_i32 = arith.constant 0 : i32
    %c0_i32_0 = arith.constant 0 : i32
    %c0_i32_1 = arith.constant 0 : i32
    %c0_i32_2 = arith.constant 0 : i32
    return %c0_i32, %c0_i32_0, %c0_i32_1 : i32, i32, i32
  }
  func.func @transform_2(%arg0: i32) -> (i32, i32, i32) {
    %c0_i32 = arith.constant 0 : i32
    %c0_i32_0 = arith.constant 0 : i32
    %c0_i32_1 = arith.constant 0 : i32
    return %arg0, %c0_i32, %c0_i32_0 : i32, i32, i32
  }
}

</mosaic_0001>

<llo_original>
// kernel: tpu_custom_call.1
$region0: #{tpu_custom_call.1}
  #allocation0 [shape = 'u32[]', space=smem, size = 0x4, offset = 0x4, fixed_abs, tag = 'smem constant byte address 0x4 - core index']
  #allocation1 [shape = 'u32[72,128]{1,0:T(1,128)}', space=vmem, size = 0x9000, scoped, tag = 'internal scratch']
  %s0 = inlined_call_operand.hbm [shape: bf16[32,128,128], index: 0, kind: input, shape index: {}]
  %s1 = inlined_call_operand.vmem [shape: bf16[16,1,128], index: 1, kind: input, shape index: {}]
  %s2 = inlined_call_operand.hbm [shape: f32[32,1,128], index: 2, kind: output, shape index: {}]
  %s3 = sld [smem:[#allocation0]]
  $region45: #{tpu_custom_call.1} parent=0
    _
  %s5 = ssub.s32 1, %s3
  %s6 = scalar_select 0, %s5, %s3
  $region1: #{tpu_custom_call.1} parent=0
    #allocation2 [shape = 'u8[1048576]{0}', space=vmem, size = 0x100000, scoped, tag = 'input window, operand 0']
    #allocation3 [shape = 's32[2]{0}', space=sflag, size = 0x8, scoped, tag = 'scoped memory for tpu_custom_call.1']
    #allocation4 [shape = 's32[2]{0}', space=sflag, size = 0x8, scoped, tag = 'scoped memory for tpu_custom_call.1']
    #allocation5 [shape = 'u8[16384]{0}', space=vmem, size = 0x4000, scoped, tag = 'output window, operand 0']
    %7 = vsyncpa [#allocation3], 0
    %s8 = scalar_lea.sflag [#allocation3], 1
    %9 = vsyncpa %s8, 0
    %10 = vsyncpa [#allocation4], 0
    %s11 = scalar_lea.sflag [#allocation4], 1
    %12 = vsyncpa %s11, 0
    loop: start=0, step=1, limit=4
    $region2: #{tpu_custom_call.1} parent=1 // loop_pre_header
      _
    $region3: #{tpu_custom_call.1} parent=1 // loop_header
      %s14 = sphi 0, %s18
      %p15 = scmp.ge.s32.totalorder %s14, 4
      %s24 = sphi 0, %s26
      %s27 = sphi 0, %s24
      %s28 = sphi 0, %s27
      %s44 = sphi 0, %s28
      %s48 = sphi 0, %s48
      %s50 = sphi 0, %s48
      %s51 = sphi 0, %s50
      %s65 = sphi 0, %s51
      %s71 = sphi 0, %s73
      %s74 = sphi 0, %s71
      %s75 = sphi 0, %s74
      %s91 = sphi 0, %s75
    $region4: #{tpu_custom_call.1} parent=1 // loop_header_branch
      %17 = sbr.rel (%p15) target = $region8
    $region5: #{tpu_custom_call.1} parent=1 // loop_body
      %s19 = ssub.s32 %s14, 1
      %s20 = ssub.s32 %s14, 2
      %s21 = sadd.s32 %s14, 1
      %s22 = ssub.s32 %s14, %s21
      %p23 = scmp.eq.s32.totalorder %s22, 0
      %s25 = sadd.s32 %s24, 1
      %s26 = scalar_select %p23, %s24, %s25
      %p29 = pneg %p23
      %p30 = scmp.eq.s32.totalorder %s14, 1
      %p31 = por %p29, %p30
      %p32 = scmp.ne.s32.totalorder %s24, %s27
      %p33 = scmp.eq.s32.totalorder %s14, 0
      %p34 = por %p32, %p33
      %p35 = scmp.ne.s32.totalorder %s24, %s27
      %p36 = scmp.eq.s32.totalorder %s19, 1
      %p37 = por %p35, %p36
      %p38 = scmp.ne.s32.totalorder %s27, %s28
      %p39 = scmp.eq.s32.totalorder %s19, 0
      %p40 = por %p38, %p39
      %p41 = scmp.ne.s32.totalorder %s27, %s28
      %p42 = scmp.eq.s32.totalorder %s20, 1
      %p43 = por %p41, %p42
      %p45 = scmp.ne.s32.totalorder %s28, %s44
      %p46 = scmp.eq.s32.totalorder %s20, 0
      %p47 = por %p45, %p46
      %s49 = sadd.s32 %s48, 1
      %p52 = scmp.eq.s32.totalorder %s14, 1
      %p53 = scmp.ne.s32.totalorder %s48, %s50
      %p54 = scmp.eq.s32.totalorder %s14, 0
      %p55 = por %p53, %p54
      %p56 = scmp.ne.s32.totalorder %s48, %s50
      %p57 = scmp.eq.s32.totalorder %s19, 1
      %p58 = por %p56, %p57
      %p59 = scmp.ne.s32.totalorder %s50, %s51
      %p60 = scmp.eq.s32.totalorder %s19, 0
      %p61 = por %p59, %p60
      %p62 = scmp.ne.s32.totalorder %s50, %s51
      %p63 = scmp.eq.s32.totalorder %s20, 1
      %p64 = por %p62, %p63
      %p66 = scmp.ne.s32.totalorder %s51, %s65
      %p67 = scmp.eq.s32.totalorder %s20, 0
      %p68 = por %p66, %p67
      %s69 = ssub.s32 %s14, %s21
      %p70 = scmp.eq.s32.totalorder %s69, 0
      %s72 = sadd.s32 %s71, 1
      %s73 = scalar_select %p70, %s71, %s72
      %p76 = pneg %p70
      %p77 = scmp.eq.s32.totalorder %s14, 1
      %p78 = por %p76, %p77
      %p79 = scmp.ne.s32.totalorder %s71, %s74
      %p80 = scmp.eq.s32.totalorder %s14, 0
      %p81 = por %p79, %p80
      %p82 = scmp.ne.s32.totalorder %s71, %s74
      %p83 = scmp.eq.s32.totalorder %s19, 1
      %p84 = por %p82, %p83
      %p85 = scmp.ne.s32.totalorder %s74, %s75
      %p86 = scmp.eq.s32.totalorder %s19, 0
      %p87 = por %p85, %p86
      %p88 = scmp.ne.s32.totalorder %s74, %s75
      %p89 = scmp.eq.s32.totalorder %s20, 1
      %p90 = por %p88, %p89
      %p92 = scmp.ne.s32.totalorder %s75, %s91
      %p93 = scmp.eq.s32.totalorder %s20, 0
      %p94 = por %p92, %p93
      %p95 = scmp.le.s32.totalorder 1, %s14
      %p96 = scmp.lt.s32.totalorder %s14, 3
      %p97 = pnand %p95, %p96
      %p98 = pneg %p97
      // Predicated region
      $region9: #{tpu_custom_call.1} parent=5 // pred_check
        _
      $region10: #{tpu_custom_call.1} parent=5 // pred_check_branch
        %100 = sbr.rel (%p97) target = $region12
      $region11: #{tpu_custom_call.1} parent=5 // pred_region
        %s101 = ssub.s32 %s14, 1
        // Predicated region
        $region13: #{tpu_custom_call.1} parent=11 // pred_check
          %p102 = pneg %p61
        $region14: #{tpu_custom_call.1} parent=11 // pred_check_branch
          %104 = sbr.rel (%p102) target = $region16
        $region15: #{tpu_custom_call.1} parent=11 // pred_region
          _
        $region16: #{tpu_custom_call.1} parent=11 // pred_fallthru
          _
      $region12: #{tpu_custom_call.1} parent=5 // pred_fallthru
        _
      %p105 = scmp.lt.s32.totalorder %s14, 2
      // Predicated region
      $region17: #{tpu_custom_call.1} parent=5 // pred_check
        %p106 = pneg %p105
      $region18: #{tpu_custom_call.1} parent=5 // pred_check_branch
        %108 = sbr.rel (%p106) target = $region20
      $region19: #{tpu_custom_call.1} parent=5 // pred_region
        // Predicated region
        $region21: #{tpu_custom_call.1} parent=19 // pred_check
          %p109 = pneg %p34
        $region22: #{tpu_custom_call.1} parent=19 // pred_check_branch
          %111 = sbr.rel (%p109) target = $region24
        $region23: #{tpu_custom_call.1} parent=19 // pred_region
          %s112 = sand.u32 %s24, 1
          %s113 = scalar_lea.sflag [#allocation3], %s112
          %s114 = sand.u32 %s24, 1
          %s115 = smul.addr %s114, 1024
          %s116 = scalar_lea.vmem [#allocation2], %s115
          %s117 = smul.u32 16, %s14
          %119 = vsyncadd %s113, 0
          %s120 = smul.addr %s117, 16
          %s121 = smul.addr %s120, 4
          %s122 = scalar_lea.hbm %s0, %s121
          %s123 = sshll.u32 %s122, 4
          %s124 = int_to_ptr.hbm [resolvable:$true] %s123
          %s125 = sshll.u32 %s116, 4
          %s126 = int_to_ptr.vmem [resolvable:$true] %s125
          %131 = dma.hbm_to_vmem [thread:$0]  %s124, 16384, %s126, %s113, 64, 64, 4
        $region24: #{tpu_custom_call.1} parent=19 // pred_fallthru
          _
      $region20: #{tpu_custom_call.1} parent=5 // pred_fallthru
        _
      %p132 = scmp.le.s32.totalorder 1, %s14
      %p133 = scmp.lt.s32.totalorder %s14, 3
      %p134 = pnand %p132, %p133
      %p135 = pneg %p134
      // Predicated region
      $region25: #{tpu_custom_call.1} parent=5 // pred_check
        _
      $region26: #{tpu_custom_call.1} parent=5 // pred_check_branch
        %137 = sbr.rel (%p134) target = $region28
      $region27: #{tpu_custom_call.1} parent=5 // pred_region
        %s138 = ssub.s32 %s14, 1
        %s139 = sand.u32 %s27, 1
        %s140 = scalar_lea.sflag [#allocation3], %s139
        %s141 = sand.u32 %s27, 1
        %s142 = smul.addr %s141, 1024
        %s143 = scalar_lea.vmem [#allocation2], %s142
        // Predicated region
        $region29: #{tpu_custom_call.1} parent=27 // pred_check
          %p144 = pneg %p40
        $region30: #{tpu_custom_call.1} parent=27 // pred_check_branch
          %146 = sbr.rel (%p144) target = $region32
        $region31: #{tpu_custom_call.1} parent=27 // pred_region
          %148 = dma.done %s140, 16384
        $region32: #{tpu_custom_call.1} parent=27 // pred_fallthru
          _
        %s149 = sand.u32 %s27, 1
        %s150 = scalar_lea.sflag [#allocation3], %s149
        %s151 = sand.u32 %s27, 1
        %s152 = smul.addr %s151, 1024
        %s153 = scalar_lea.vmem [#allocation2], %s152
        %p154 = pneg %p40
        %p155 = pneg %p37
        %p156 = pneg %p61
        %p157 = pneg %p58
        %p158 = pneg %p87
        %p159 = pneg %p84
        %s160 = sand.u32 %s74, 1
        %s161 = scalar_lea.sflag [#allocation4], %s160
        %s162 = sand.u32 %s74, 1
        %s163 = smul.addr %s162, 16
        %s164 = scalar_lea.vmem [#allocation5], %s163
        %s165 = smul.u32 16, %s19
        %s166 = smul.u32 16, %s19
        %v167 = vld [vmem:[%s1] sm:$0x1]
        %v168 = vld [vmem:[%s1 + $0x1] sm:$0x1]
        %v169 = vld [vmem:[%s1 + $0x2] sm:$0x1]
        %v170 = vld [vmem:[%s1 + $0x3] sm:$0x1]
        %v171 = vld [vmem:[%s1 + $0x4] sm:$0x1]
        %v172 = vld [vmem:[%s1 + $0x5] sm:$0x1]
        %v173 = vld [vmem:[%s1 + $0x6] sm:$0x1]
        %v174 = vld [vmem:[%s1 + $0x7] sm:$0x1]
        %v175 = vld [vmem:[%s1 + $0x8] sm:$0x1]
        %v176 = vld [vmem:[%s1 + $0x9] sm:$0x1]
        %v177 = vld [vmem:[%s1 + $0xa] sm:$0x1]
        %v178 = vld [vmem:[%s1 + $0xb] sm:$0x1]
        %v179 = vld [vmem:[%s1 + $0xc] sm:$0x1]
        %v180 = vld [vmem:[%s1 + $0xd] sm:$0x1]
        %v181 = vld [vmem:[%s1 + $0xe] sm:$0x1]
        %v182 = vld [vmem:[%s1 + $0xf] sm:$0x1]
        %v183 = vld [vmem:[%s143] sm:$0xf]
        %v184 = vld [vmem:[%s143 + $0x4] sm:$0xf]
        %v185 = vld [vmem:[%s143 + $0x8] sm:$0xf]
        %v186 = vld [vmem:[%s143 + $0xc] sm:$0xf]
        %v187 = vld [vmem:[%s143 + $0x10] sm:$0xf]
        %v188 = vld [vmem:[%s143 + $0x14] sm:$0xf]
        %v189 = vld [vmem:[%s143 + $0x18] sm:$0xf]
        %v190 = vld [vmem:[%s143 + $0x1c] sm:$0xf]
        %v191 = vld [vmem:[%s143 + $0x20] sm:$0xf]
        %v192 = vld [vmem:[%s143 + $0x24] sm:$0xf]
        %v193 = vld [vmem:[%s143 + $0x28] sm:$0xf]
        %v194 = vld [vmem:[%s143 + $0x2c] sm:$0xf]
        %v195 = vld [vmem:[%s143 + $0x30] sm:$0xf]
        %v196 = vld [vmem:[%s143 + $0x34] sm:$0xf]
        %v197 = vld [vmem:[%s143 + $0x38] sm:$0xf]
        %v198 = vld [vmem:[%s143 + $0x3c] sm:$0xf]
        %v199 = vld [vmem:[%s143 + $0x40] sm:$0xf]
        %v200 = vld [vmem:[%s143 + $0x44] sm:$0xf]
        %v201 = vld [vmem:[%s143 + $0x48] sm:$0xf]
        %v202 = vld [vmem:[%s143 + $0x4c] sm:$0xf]
        %v203 = vld [vmem:[%s143 + $0x50] sm:$0xf]
        %v204 = vld [vmem:[%s143 + $0x54] sm:$0xf]
        %v205 = vld [vmem:[%s143 + $0x58] sm:$0xf]
        %v206 = vld [vmem:[%s143 + $0x5c] sm:$0xf]
        %v207 = vld [vmem:[%s143 + $0x60] sm:$0xf]
        %v208 = vld [vmem:[%s143 + $0x64] sm:$0xf]
        %v209 = vld [vmem:[%s143 + $0x68] sm:$0xf]
        %v210 = vld [vmem:[%s143 + $0x6c] sm:$0xf]
        %v211 = vld [vmem:[%s143 + $0x70] sm:$0xf]
        %v212 = vld [vmem:[%s143 + $0x74] sm:$0xf]
        %v213 = vld [vmem:[%s143 + $0x78] sm:$0xf]
        %v214 = vld [vmem:[%s143 + $0x7c] sm:$0xf]
        %v215 = vld [vmem:[%s143 + $0x80] sm:$0xf]
        %v216 = vld [vmem:[%s143 + $0x84] sm:$0xf]
        %v217 = vld [vmem:[%s143 + $0x88] sm:$0xf]
        %v218 = vld [vmem:[%s143 + $0x8c] sm:$0xf]
        %v219 = vld [vmem:[%s143 + $0x90] sm:$0xf]
        %v220 = vld [vmem:[%s143 + $0x94] sm:$0xf]
        %v221 = vld [vmem:[%s143 + $0x98] sm:$0xf]
        %v222 = vld [vmem:[%s143 + $0x9c] sm:$0xf]
        %v223 = vld [vmem:[%s143 + $0xa0] sm:$0xf]
        %v224 = vld [vmem:[%s143 + $0xa4] sm:$0xf]
        %v225 = vld [vmem:[%s143 + $0xa8] sm:$0xf]
        %v226 = vld [vmem:[%s143 + $0xac] sm:$0xf]
        %v227 = vld [vmem:[%s143 + $0xb0] sm:$0xf]
        %v228 = vld [vmem:[%s143 + $0xb4] sm:$0xf]
        %v229 = vld [vmem:[%s143 + $0xb8] sm:$0xf]
        %v230 = vld [vmem:[%s143 + $0xbc] sm:$0xf]
        %v231 = vld [vmem:[%s143 + $0xc0] sm:$0xf]
        %v232 = vld [vmem:[%s143 + $0xc4] sm:$0xf]
        %v233 = vld [vmem:[%s143 + $0xc8] sm:$0xf]
        %v234 = vld [vmem:[%s143 + $0xcc] sm:$0xf]
        %v235 = vld [vmem:[%s143 + $0xd0] sm:$0xf]
        %v236 = vld [vmem:[%s143 + $0xd4] sm:$0xf]
        %v237 = vld [vmem:[%s143 + $0xd8] sm:$0xf]
        %v238 = vld [vmem:[%s143 + $0xdc] sm:$0xf]
        %v239 = vld [vmem:[%s143 + $0xe0] sm:$0xf]
        %v240 = vld [vmem:[%s143 + $0xe4] sm:$0xf]
        %v241 = vld [vmem:[%s143 + $0xe8] sm:$0xf]
        %v242 = vld [vmem:[%s143 + $0xec] sm:$0xf]
        %v243 = vld [vmem:[%s143 + $0xf0] sm:$0xf]
        %v244 = vld [vmem:[%s143 + $0xf4] sm:$0xf]
        %v245 = vld [vmem:[%s143 + $0xf8] sm:$0xf]
        %v246 = vld [vmem:[%s143 + $0xfc] sm:$0xf]
        %v247 = vld [vmem:[%s143 + $0x100] sm:$0xf]
        %v248 = vld [vmem:[%s143 + $0x104] sm:$0xf]
        %v249 = vld [vmem:[%s143 + $0x108] sm:$0xf]
        %v250 = vld [vmem:[%s143 + $0x10c] sm:$0xf]
        %v251 = vld [vmem:[%s143 + $0x110] sm:$0xf]
        %v252 = vld [vmem:[%s143 + $0x114] sm:$0xf]
        %v253 = vld [vmem:[%s143 + $0x118] sm:$0xf]
        %v254 = vld [vmem:[%s143 + $0x11c] sm:$0xf]
        %v255 = vld [vmem:[%s143 + $0x120] sm:$0xf]
        %v256 = vld [vmem:[%s143 + $0x124] sm:$0xf]
        %v257 = vld [vmem:[%s143 + $0x128] sm:$0xf]
        %v258 = vld [vmem:[%s143 + $0x12c] sm:$0xf]
        %v259 = vld [vmem:[%s143 + $0x130] sm:$0xf]
        %v260 = vld [vmem:[%s143 + $0x134] sm:$0xf]
        %v261 = vld [vmem:[%s143 + $0x138] sm:$0xf]
        %v262 = vld [vmem:[%s143 + $0x13c] sm:$0xf]
        %v263 = vld [vmem:[%s143 + $0x140] sm:$0xf]
        %v264 = vld [vmem:[%s143 + $0x144] sm:$0xf]
        %v265 = vld [vmem:[%s143 + $0x148] sm:$0xf]
        %v266 = vld [vmem:[%s143 + $0x14c] sm:$0xf]
        %v267 = vld [vmem:[%s143 + $0x150] sm:$0xf]
        %v268 = vld [vmem:[%s143 + $0x154] sm:$0xf]
        %v269 = vld [vmem:[%s143 + $0x158] sm:$0xf]
        %v270 = vld [vmem:[%s143 + $0x15c] sm:$0xf]
        %v271 = vld [vmem:[%s143 + $0x160] sm:$0xf]
        %v272 = vld [vmem:[%s143 + $0x164] sm:$0xf]
        %v273 = vld [vmem:[%s143 + $0x168] sm:$0xf]
        %v274 = vld [vmem:[%s143 + $0x16c] sm:$0xf]
        %v275 = vld [vmem:[%s143 + $0x170] sm:$0xf]
        %v276 = vld [vmem:[%s143 + $0x174] sm:$0xf]
        %v277 = vld [vmem:[%s143 + $0x178] sm:$0xf]
        %v278 = vld [vmem:[%s143 + $0x17c] sm:$0xf]
        %v279 = vld [vmem:[%s143 + $0x180] sm:$0xf]
        %v280 = vld [vmem:[%s143 + $0x184] sm:$0xf]
        %v281 = vld [vmem:[%s143 + $0x188] sm:$0xf]
        %v282 = vld [vmem:[%s143 + $0x18c] sm:$0xf]
        %v283 = vld [vmem:[%s143 + $0x190] sm:$0xf]
        %v284 = vld [vmem:[%s143 + $0x194] sm:$0xf]
        %v285 = vld [vmem:[%s143 + $0x198] sm:$0xf]
        %v286 = vld [vmem:[%s143 + $0x19c] sm:$0xf]
        %v287 = vld [vmem:[%s143 + $0x1a0] sm:$0xf]
        %v288 = vld [vmem:[%s143 + $0x1a4] sm:$0xf]
        %v289 = vld [vmem:[%s143 + $0x1a8] sm:$0xf]
        %v290 = vld [vmem:[%s143 + $0x1ac] sm:$0xf]
        %v291 = vld [vmem:[%s143 + $0x1b0] sm:$0xf]
        %v292 = vld [vmem:[%s143 + $0x1b4] sm:$0xf]
        %v293 = vld [vmem:[%s143 + $0x1b8] sm:$0xf]
        %v294 = vld [vmem:[%s143 + $0x1bc] sm:$0xf]
        %v295 = vld [vmem:[%s143 + $0x1c0] sm:$0xf]
        %v296 = vld [vmem:[%s143 + $0x1c4] sm:$0xf]
        %v297 = vld [vmem:[%s143 + $0x1c8] sm:$0xf]
        %v298 = vld [vmem:[%s143 + $0x1cc] sm:$0xf]
        %v299 = vld [vmem:[%s143 + $0x1d0] sm:$0xf]
        %v300 = vld [vmem:[%s143 + $0x1d4] sm:$0xf]
        %v301 = vld [vmem:[%s143 + $0x1d8] sm:$0xf]
        %v302 = vld [vmem:[%s143 + $0x1dc] sm:$0xf]
        %v303 = vld [vmem:[%s143 + $0x1e0] sm:$0xf]
        %v304 = vld [vmem:[%s143 + $0x1e4] sm:$0xf]
        %v305 = vld [vmem:[%s143 + $0x1e8] sm:$0xf]
        %v306 = vld [vmem:[%s143 + $0x1ec] sm:$0xf]
        %v307 = vld [vmem:[%s143 + $0x1f0] sm:$0xf]
        %v308 = vld [vmem:[%s143 + $0x1f4] sm:$0xf]
        %v309 = vld [vmem:[%s143 + $0x1f8] sm:$0xf]
        %v310 = vld [vmem:[%s143 + $0x1fc] sm:$0xf]
        %v311 = vld [vmem:[%s143 + $0x200] sm:$0xf]
        %v312 = vld [vmem:[%s143 + $0x204] sm:$0xf]
        %v313 = vld [vmem:[%s143 + $0x208] sm:$0xf]
        %v314 = vld [vmem:[%s143 + $0x20c] sm:$0xf]
        %v315 = vld [vmem:[%s143 + $0x210] sm:$0xf]
        %v316 = vld [vmem:[%s143 + $0x214] sm:$0xf]
        %v317 = vld [vmem:[%s143 + $0x218] sm:$0xf]
        %v318 = vld [vmem:[%s143 + $0x21c] sm:$0xf]
        %v319 = vld [vmem:[%s143 + $0x220] sm:$0xf]
        %v320 = vld [vmem:[%s143 + $0x224] sm:$0xf]
        %v321 = vld [vmem:[%s143 + $0x228] sm:$0xf]
        %v322 = vld [vmem:[%s143 + $0x22c] sm:$0xf]
        %v323 = vld [vmem:[%s143 + $0x230] sm:$0xf]
        %v324 = vld [vmem:[%s143 + $0x234] sm:$0xf]
        %v325 = vld [vmem:[%s143 + $0x238] sm:$0xf]
        %v326 = vld [vmem:[%s143 + $0x23c] sm:$0xf]
        %v327 = vld [vmem:[%s143 + $0x240] sm:$0xf]
        %v328 = vld [vmem:[%s143 + $0x244] sm:$0xf]
        %v329 = vld [vmem:[%s143 + $0x248] sm:$0xf]
        %v330 = vld [vmem:[%s143 + $0x24c] sm:$0xf]
        %v331 = vld [vmem:[%s143 + $0x250] sm:$0xf]
        %v332 = vld [vmem:[%s143 + $0x254] sm:$0xf]
        %v333 = vld [vmem:[%s143 + $0x258] sm:$0xf]
        %v334 = vld [vmem:[%s143 + $0x25c] sm:$0xf]
        %v335 = vld [vmem:[%s143 + $0x260] sm:$0xf]
        %v336 = vld [vmem:[%s143 + $0x264] sm:$0xf]
        %v337 = vld [vmem:[%s143 + $0x268] sm:$0xf]
        %v338 = vld [vmem:[%s143 + $0x26c] sm:$0xf]
        %v339 = vld [vmem:[%s143 + $0x270] sm:$0xf]
        %v340 = vld [vmem:[%s143 + $0x274] sm:$0xf]
        %v341 = vld [vmem:[%s143 + $0x278] sm:$0xf]
        %v342 = vld [vmem:[%s143 + $0x27c] sm:$0xf]
        %v343 = vld [vmem:[%s143 + $0x280] sm:$0xf]
        %v344 = vld [vmem:[%s143 + $0x284] sm:$0xf]
        %v345 = vld [vmem:[%s143 + $0x288] sm:$0xf]
        %v346 = vld [vmem:[%s143 + $0x28c] sm:$0xf]
        %v347 = vld [vmem:[%s143 + $0x290] sm:$0xf]
        %v348 = vld [vmem:[%s143 + $0x294] sm:$0xf]
        %v349 = vld [vmem:[%s143 + $0x298] sm:$0xf]
        %v350 = vld [vmem:[%s143 + $0x29c] sm:$0xf]
        %v351 = vld [vmem:[%s143 + $0x2a0] sm:$0xf]
        %v352 = vld [vmem:[%s143 + $0x2a4] sm:$0xf]
        %v353 = vld [vmem:[%s143 + $0x2a8] sm:$0xf]
        %v354 = vld [vmem:[%s143 + $0x2ac] sm:$0xf]
        %v355 = vld [vmem:[%s143 + $0x2b0] sm:$0xf]
        %v356 = vld [vmem:[%s143 + $0x2b4] sm:$0xf]
        %v357 = vld [vmem:[%s143 + $0x2b8] sm:$0xf]
        %v358 = vld [vmem:[%s143 + $0x2bc] sm:$0xf]
        %v359 = vld [vmem:[%s143 + $0x2c0] sm:$0xf]
        %v360 = vld [vmem:[%s143 + $0x2c4] sm:$0xf]
        %v361 = vld [vmem:[%s143 + $0x2c8] sm:$0xf]
        %v362 = vld [vmem:[%s143 + $0x2cc] sm:$0xf]
        %v363 = vld [vmem:[%s143 + $0x2d0] sm:$0xf]
        %v364 = vld [vmem:[%s143 + $0x2d4] sm:$0xf]
        %v365 = vld [vmem:[%s143 + $0x2d8] sm:$0xf]
        %v366 = vld [vmem:[%s143 + $0x2dc] sm:$0xf]
        %v367 = vld [vmem:[%s143 + $0x2e0] sm:$0xf]
        %v368 = vld [vmem:[%s143 + $0x2e4] sm:$0xf]
        %v369 = vld [vmem:[%s143 + $0x2e8] sm:$0xf]
        %v370 = vld [vmem:[%s143 + $0x2ec] sm:$0xf]
        %v371 = vld [vmem:[%s143 + $0x2f0] sm:$0xf]
        %v372 = vld [vmem:[%s143 + $0x2f4] sm:$0xf]
        %v373 = vld [vmem:[%s143 + $0x2f8] sm:$0xf]
        %v374 = vld [vmem:[%s143 + $0x2fc] sm:$0xf]
        %v375 = vld [vmem:[%s143 + $0x300] sm:$0xf]
        %v376 = vld [vmem:[%s143 + $0x304] sm:$0xf]
        %v377 = vld [vmem:[%s143 + $0x308] sm:$0xf]
        %v378 = vld [vmem:[%s143 + $0x30c] sm:$0xf]
        %v379 = vld [vmem:[%s143 + $0x310] sm:$0xf]
        %v380 = vld [vmem:[%s143 + $0x314] sm:$0xf]
        %v381 = vld [vmem:[%s143 + $0x318] sm:$0xf]
        %v382 = vld [vmem:[%s143 + $0x31c] sm:$0xf]
        %v383 = vld [vmem:[%s143 + $0x320] sm:$0xf]
        %v384 = vld [vmem:[%s143 + $0x324] sm:$0xf]
        %v385 = vld [vmem:[%s143 + $0x328] sm:$0xf]
        %v386 = vld [vmem:[%s143 + $0x32c] sm:$0xf]
        %v387 = vld [vmem:[%s143 + $0x330] sm:$0xf]
        %v388 = vld [vmem:[%s143 + $0x334] sm:$0xf]
        %v389 = vld [vmem:[%s143 + $0x338] sm:$0xf]
        %v390 = vld [vmem:[%s143 + $0x33c] sm:$0xf]
        %v391 = vld [vmem:[%s143 + $0x340] sm:$0xf]
        %v392 = vld [vmem:[%s143 + $0x344] sm:$0xf]
        %v393 = vld [vmem:[%s143 + $0x348] sm:$0xf]
        %v394 = vld [vmem:[%s143 + $0x34c] sm:$0xf]
        %v395 = vld [vmem:[%s143 + $0x350] sm:$0xf]
        %v396 = vld [vmem:[%s143 + $0x354] sm:$0xf]
        %v397 = vld [vmem:[%s143 + $0x358] sm:$0xf]
        %v398 = vld [vmem:[%s143 + $0x35c] sm:$0xf]
        %v399 = vld [vmem:[%s143 + $0x360] sm:$0xf]
        %v400 = vld [vmem:[%s143 + $0x364] sm:$0xf]
        %v401 = vld [vmem:[%s143 + $0x368] sm:$0xf]
        %v402 = vld [vmem:[%s143 + $0x36c] sm:$0xf]
        %v403 = vld [vmem:[%s143 + $0x370] sm:$0xf]
        %v404 = vld [vmem:[%s143 + $0x374] sm:$0xf]
        %v405 = vld [vmem:[%s143 + $0x378] sm:$0xf]
        %v406 = vld [vmem:[%s143 + $0x37c] sm:$0xf]
        %v407 = vld [vmem:[%s143 + $0x380] sm:$0xf]
        %v408 = vld [vmem:[%s143 + $0x384] sm:$0xf]
        %v409 = vld [vmem:[%s143 + $0x388] sm:$0xf]
        %v410 = vld [vmem:[%s143 + $0x38c] sm:$0xf]
        %v411 = vld [vmem:[%s143 + $0x390] sm:$0xf]
        %v412 = vld [vmem:[%s143 + $0x394] sm:$0xf]
        %v413 = vld [vmem:[%s143 + $0x398] sm:$0xf]
        %v414 = vld [vmem:[%s143 + $0x39c] sm:$0xf]
        %v415 = vld [vmem:[%s143 + $0x3a0] sm:$0xf]
        %v416 = vld [vmem:[%s143 + $0x3a4] sm:$0xf]
        %v417 = vld [vmem:[%s143 + $0x3a8] sm:$0xf]
        %v418 = vld [vmem:[%s143 + $0x3ac] sm:$0xf]
        %v419 = vld [vmem:[%s143 + $0x3b0] sm:$0xf]
        %v420 = vld [vmem:[%s143 + $0x3b4] sm:$0xf]
        %v421 = vld [vmem:[%s143 + $0x3b8] sm:$0xf]
        %v422 = vld [vmem:[%s143 + $0x3bc] sm:$0xf]
        %v423 = vld [vmem:[%s143 + $0x3c0] sm:$0xf]
        %v424 = vld [vmem:[%s143 + $0x3c4] sm:$0xf]
        %v425 = vld [vmem:[%s143 + $0x3c8] sm:$0xf]
        %v426 = vld [vmem:[%s143 + $0x3cc] sm:$0xf]
        %v427 = vld [vmem:[%s143 + $0x3d0] sm:$0xf]
        %v428 = vld [vmem:[%s143 + $0x3d4] sm:$0xf]
        %v429 = vld [vmem:[%s143 + $0x3d8] sm:$0xf]
        %v430 = vld [vmem:[%s143 + $0x3dc] sm:$0xf]
        %v431 = vld [vmem:[%s143 + $0x3e0] sm:$0xf]
        %v432 = vld [vmem:[%s143 + $0x3e4] sm:$0xf]
        %v433 = vld [vmem:[%s143 + $0x3e8] sm:$0xf]
        %v434 = vld [vmem:[%s143 + $0x3ec] sm:$0xf]
        %v435 = vld [vmem:[%s143 + $0x3f0] sm:$0xf]
        %v436 = vld [vmem:[%s143 + $0x3f4] sm:$0xf]
        %v437 = vld [vmem:[%s143 + $0x3f8] sm:$0xf]
        %v438 = vld [vmem:[%s143 + $0x3fc] sm:$0xf]
        %v455 = vunpack.c.l.b16 %v183
        %v456 = vunpack.c.l.b16 %v184
        %v457 = vunpack.c.l.b16 %v185
        %v458 = vunpack.c.l.b16 %v186
        %v459 = vunpack.c.l.b16 %v187
        %v460 = vunpack.c.l.b16 %v188
        %v461 = vunpack.c.l.b16 %v189
        %v462 = vunpack.c.l.b16 %v190
        %v463 = vunpack.c.l.b16 %v191
        %v464 = vunpack.c.l.b16 %v192
        %v465 = vunpack.c.l.b16 %v193
        %v466 = vunpack.c.l.b16 %v194
        %v467 = vunpack.c.l.b16 %v195
        %v468 = vunpack.c.l.b16 %v196
        %v469 = vunpack.c.l.b16 %v197
        %v470 = vunpack.c.l.b16 %v198
        %v471 = vpack.c.b16 %v456, %v455
        %v472 = vpack.c.b16 %v458, %v457
        %v473 = vpack.c.b16 %v460, %v459
        %v474 = vpack.c.b16 %v462, %v461
        %v475 = vpack.c.b16 %v464, %v463
        %v476 = vpack.c.b16 %v466, %v465
        %v477 = vpack.c.b16 %v468, %v467
        %v478 = vpack.c.b16 %v470, %v469
        %487 = vmatpush.bf16.xpose.msra.mxu0 %v478
        %488 = vmatpush.bf16.xpose.msra.mxu0 %v477
        %489 = vmatpush.bf16.xpose.msra.mxu0 %v476
        %490 = vmatpush.bf16.xpose.msra.mxu0 %v475
        %491 = vmatpush.bf16.xpose.msra.mxu0 %v474
        %492 = vmatpush.bf16.xpose.msra.mxu0 %v473
        %493 = vmatpush.bf16.xpose.msra.mxu0 %v472
        %494 = vmatpush.bf16.xpose.msra.mxu0 %v471
        %495 = vmatmul.bf16.gmra.mxu0 %v167
        %v496 = vpop.f32.mrf.mxu0
        %v497 = vadd.f32 0.0, %v496
        %v498 = vpop.f32.mrf.mxu0
        %499 = vdwg.mxu0
        %v516 = vunpack.c.l.b16 %v199
        %v517 = vunpack.c.l.b16 %v200
        %v518 = vunpack.c.l.b16 %v201
        %v519 = vunpack.c.l.b16 %v202
        %v520 = vunpack.c.l.b16 %v203
        %v521 = vunpack.c.l.b16 %v204
        %v522 = vunpack.c.l.b16 %v205
        %v523 = vunpack.c.l.b16 %v206
        %v524 = vunpack.c.l.b16 %v207
        %v525 = vunpack.c.l.b16 %v208
        %v526 = vunpack.c.l.b16 %v209
        %v527 = vunpack.c.l.b16 %v210
        %v528 = vunpack.c.l.b16 %v211
        %v529 = vunpack.c.l.b16 %v212
        %v530 = vunpack.c.l.b16 %v213
        %v531 = vunpack.c.l.b16 %v214
        %v532 = vpack.c.b16 %v517, %v516
        %v533 = vpack.c.b16 %v519, %v518
        %v534 = vpack.c.b16 %v521, %v520
        %v535 = vpack.c.b16 %v523, %v522
        %v536 = vpack.c.b16 %v525, %v524
        %v537 = vpack.c.b16 %v527, %v526
        %v538 = vpack.c.b16 %v529, %v528
        %v539 = vpack.c.b16 %v531, %v530
        %548 = vmatpush.bf16.xpose.msra.mxu0 %v539
        %549 = vmatpush.bf16.xpose.msra.mxu0 %v538
        %550 = vmatpush.bf16.xpose.msra.mxu0 %v537
        %551 = vmatpush.bf16.xpose.msra.mxu0 %v536
        %552 = vmatpush.bf16.xpose.msra.mxu0 %v535
        %553 = vmatpush.bf16.xpose.msra.mxu0 %v534
        %554 = vmatpush.bf16.xpose.msra.mxu0 %v533
        %555 = vmatpush.bf16.xpose.msra.mxu0 %v532
        %556 = vmatmul.bf16.gmra.mxu0 %v168
        %v557 = vpop.f32.mrf.mxu0
        %v558 = vadd.f32 0.0, %v557
        %v559 = vpop.f32.mrf.mxu0
        %560 = vdwg.mxu0
        %v577 = vunpack.c.l.b16 %v215
        %v578 = vunpack.c.l.b16 %v216
        %v579 = vunpack.c.l.b16 %v217
        %v580 = vunpack.c.l.b16 %v218
        %v581 = vunpack.c.l.b16 %v219
        %v582 = vunpack.c.l.b16 %v220
        %v583 = vunpack.c.l.b16 %v221
        %v584 = vunpack.c.l.b16 %v222
        %v585 = vunpack.c.l.b16 %v223
        %v586 = vunpack.c.l.b16 %v224
        %v587 = vunpack.c.l.b16 %v225
        %v588 = vunpack.c.l.b16 %v226
        %v589 = vunpack.c.l.b16 %v227
        %v590 = vunpack.c.l.b16 %v228
        %v591 = vunpack.c.l.b16 %v229
        %v592 = vunpack.c.l.b16 %v230
        %v593 = vpack.c.b16 %v578, %v577
        %v594 = vpack.c.b16 %v580, %v579
        %v595 = vpack.c.b16 %v582, %v581
        %v596 = vpack.c.b16 %v584, %v583
        %v597 = vpack.c.b16 %v586, %v585
        %v598 = vpack.c.b16 %v588, %v587
        %v599 = vpack.c.b16 %v590, %v589
        %v600 = vpack.c.b16 %v592, %v591
        %609 = vmatpush.bf16.xpose.msra.mxu0 %v600
        %610 = vmatpush.bf16.xpose.msra.mxu0 %v599
        %611 = vmatpush.bf16.xpose.msra.mxu0 %v598
        %612 = vmatpush.bf16.xpose.msra.mxu0 %v597
        %613 = vmatpush.bf16.xpose.msra.mxu0 %v596
        %614 = vmatpush.bf16.xpose.msra.mxu0 %v595
        %615 = vmatpush.bf16.xpose.msra.mxu0 %v594
        %616 = vmatpush.bf16.xpose.msra.mxu0 %v593
        %617 = vmatmul.bf16.gmra.mxu0 %v169
        %v618 = vpop.f32.mrf.mxu0
        %v619 = vadd.f32 0.0, %v618
        %v620 = vpop.f32.mrf.mxu0
        %621 = vdwg.mxu0
        %v638 = vunpack.c.l.b16 %v231
        %v639 = vunpack.c.l.b16 %v232
        %v640 = vunpack.c.l.b16 %v233
        %v641 = vunpack.c.l.b16 %v234
        %v642 = vunpack.c.l.b16 %v235
        %v643 = vunpack.c.l.b16 %v236
        %v644 = vunpack.c.l.b16 %v237
        %v645 = vunpack.c.l.b16 %v238
        %v646 = vunpack.c.l.b16 %v239
        %v647 = vunpack.c.l.b16 %v240
        %v648 = vunpack.c.l.b16 %v241
        %v649 = vunpack.c.l.b16 %v242
        %v650 = vunpack.c.l.b16 %v243
        %v651 = vunpack.c.l.b16 %v244
        %v652 = vunpack.c.l.b16 %v245
        %v653 = vunpack.c.l.b16 %v246
        %v654 = vpack.c.b16 %v639, %v638
        %v655 = vpack.c.b16 %v641, %v640
        %v656 = vpack.c.b16 %v643, %v642
        %v657 = vpack.c.b16 %v645, %v644
        %v658 = vpack.c.b16 %v647, %v646
        %v659 = vpack.c.b16 %v649, %v648
        %v660 = vpack.c.b16 %v651, %v650
        %v661 = vpack.c.b16 %v653, %v652
        %670 = vmatpush.bf16.xpose.msra.mxu0 %v661
        %671 = vmatpush.bf16.xpose.msra.mxu0 %v660
        %672 = vmatpush.bf16.xpose.msra.mxu0 %v659
        %673 = vmatpush.bf16.xpose.msra.mxu0 %v658
        %674 = vmatpush.bf16.xpose.msra.mxu0 %v657
        %675 = vmatpush.bf16.xpose.msra.mxu0 %v656
        %676 = vmatpush.bf16.xpose.msra.mxu0 %v655
        %677 = vmatpush.bf16.xpose.msra.mxu0 %v654
        %678 = vmatmul.bf16.gmra.mxu0 %v170
        %v679 = vpop.f32.mrf.mxu0
        %v680 = vadd.f32 0.0, %v679
        %v681 = vpop.f32.mrf.mxu0
        %682 = vdwg.mxu0
        %v699 = vunpack.c.l.b16 %v247
        %v700 = vunpack.c.l.b16 %v248
        %v701 = vunpack.c.l.b16 %v249
        %v702 = vunpack.c.l.b16 %v250
        %v703 = vunpack.c.l.b16 %v251
        %v704 = vunpack.c.l.b16 %v252
        %v705 = vunpack.c.l.b16 %v253
        %v706 = vunpack.c.l.b16 %v254
        %v707 = vunpack.c.l.b16 %v255
        %v708 = vunpack.c.l.b16 %v256
        %v709 = vunpack.c.l.b16 %v257
        %v710 = vunpack.c.l.b16 %v258
        %v711 = vunpack.c.l.b16 %v259
        %v712 = vunpack.c.l.b16 %v260
        %v713 = vunpack.c.l.b16 %v261
        %v714 = vunpack.c.l.b16 %v262
        %v715 = vpack.c.b16 %v700, %v699
        %v716 = vpack.c.b16 %v702, %v701
        %v717 = vpack.c.b16 %v704, %v703
        %v718 = vpack.c.b16 %v706, %v705
        %v719 = vpack.c.b16 %v708, %v707
        %v720 = vpack.c.b16 %v710, %v709
        %v721 = vpack.c.b16 %v712, %v711
        %v722 = vpack.c.b16 %v714, %v713
        %731 = vmatpush.bf16.xpose.msra.mxu0 %v722
        %732 = vmatpush.bf16.xpose.msra.mxu0 %v721
        %733 = vmatpush.bf16.xpose.msra.mxu0 %v720
        %734 = vmatpush.bf16.xpose.msra.mxu0 %v719
        %735 = vmatpush.bf16.xpose.msra.mxu0 %v718
        %736 = vmatpush.bf16.xpose.msra.mxu0 %v717
        %737 = vmatpush.bf16.xpose.msra.mxu0 %v716
        %738 = vmatpush.bf16.xpose.msra.mxu0 %v715
        %739 = vmatmul.bf16.gmra.mxu0 %v171
        %v740 = vpop.f32.mrf.mxu0
        %v741 = vadd.f32 0.0, %v740
        %v742 = vpop.f32.mrf.mxu0
        %743 = vdwg.mxu0
        %v760 = vunpack.c.l.b16 %v263
        %v761 = vunpack.c.l.b16 %v264
        %v762 = vunpack.c.l.b16 %v265
        %v763 = vunpack.c.l.b16 %v266
        %v764 = vunpack.c.l.b16 %v267
        %v765 = vunpack.c.l.b16 %v268
        %v766 = vunpack.c.l.b16 %v269
        %v767 = vunpack.c.l.b16 %v270
        %v768 = vunpack.c.l.b16 %v271
        %v769 = vunpack.c.l.b16 %v272
        %v770 = vunpack.c.l.b16 %v273
        %v771 = vunpack.c.l.b16 %v274
        %v772 = vunpack.c.l.b16 %v275
        %v773 = vunpack.c.l.b16 %v276
        %v774 = vunpack.c.l.b16 %v277
        %v775 = vunpack.c.l.b16 %v278
        %v776 = vpack.c.b16 %v761, %v760
        %v777 = vpack.c.b16 %v763, %v762
        %v778 = vpack.c.b16 %v765, %v764
        %v779 = vpack.c.b16 %v767, %v766
        %v780 = vpack.c.b16 %v769, %v768
        %v781 = vpack.c.b16 %v771, %v770
        %v782 = vpack.c.b16 %v773, %v772
        %v783 = vpack.c.b16 %v775, %v774
        %792 = vmatpush.bf16.xpose.msra.mxu0 %v783
        %793 = vmatpush.bf16.xpose.msra.mxu0 %v782
        %794 = vmatpush.bf16.xpose.msra.mxu0 %v781
        %795 = vmatpush.bf16.xpose.msra.mxu0 %v780
        %796 = vmatpush.bf16.xpose.msra.mxu0 %v779
        %797 = vmatpush.bf16.xpose.msra.mxu0 %v778
        %798 = vmatpush.bf16.xpose.msra.mxu0 %v777
        %799 = vmatpush.bf16.xpose.msra.mxu0 %v776
        %800 = vmatmul.bf16.gmra.mxu0 %v172
        %v801 = vpop.f32.mrf.mxu0
        %v802 = vadd.f32 0.0, %v801
        %v803 = vpop.f32.mrf.mxu0
        %804 = vdwg.mxu0
        %v821 = vunpack.c.l.b16 %v279
        %v822 = vunpack.c.l.b16 %v280
        %v823 = vunpack.c.l.b16 %v281
        %v824 = vunpack.c.l.b16 %v282
        %v825 = vunpack.c.l.b16 %v283
        %v826 = vunpack.c.l.b16 %v284
        %v827 = vunpack.c.l.b16 %v285
        %v828 = vunpack.c.l.b16 %v286
        %v829 = vunpack.c.l.b16 %v287
        %v830 = vunpack.c.l.b16 %v288
        %v831 = vunpack.c.l.b16 %v289
        %v832 = vunpack.c.l.b16 %v290
        %v833 = vunpack.c.l.b16 %v291
        %v834 = vunpack.c.l.b16 %v292
        %v835 = vunpack.c.l.b16 %v293
        %v836 = vunpack.c.l.b16 %v294
        %v837 = vpack.c.b16 %v822, %v821
        %v838 = vpack.c.b16 %v824, %v823
        %v839 = vpack.c.b16 %v826, %v825
        %v840 = vpack.c.b16 %v828, %v827
        %v841 = vpack.c.b16 %v830, %v829
        %v842 = vpack.c.b16 %v832, %v831
        %v843 = vpack.c.b16 %v834, %v833
        %v844 = vpack.c.b16 %v836, %v835
        %853 = vmatpush.bf16.xpose.msra.mxu0 %v844
        %854 = vmatpush.bf16.xpose.msra.mxu0 %v843
        %855 = vmatpush.bf16.xpose.msra.mxu0 %v842
        %856 = vmatpush.bf16.xpose.msra.mxu0 %v841
        %857 = vmatpush.bf16.xpose.msra.mxu0 %v840
        %858 = vmatpush.bf16.xpose.msra.mxu0 %v839
        %859 = vmatpush.bf16.xpose.msra.mxu0 %v838
        %860 = vmatpush.bf16.xpose.msra.mxu0 %v837
        %861 = vmatmul.bf16.gmra.mxu0 %v173
        %v862 = vpop.f32.mrf.mxu0
        %v863 = vadd.f32 0.0, %v862
        %v864 = vpop.f32.mrf.mxu0
        %865 = vdwg.mxu0
        %v882 = vunpack.c.l.b16 %v295
        %v883 = vunpack.c.l.b16 %v296
        %v884 = vunpack.c.l.b16 %v297
        %v885 = vunpack.c.l.b16 %v298
        %v886 = vunpack.c.l.b16 %v299
        %v887 = vunpack.c.l.b16 %v300
        %v888 = vunpack.c.l.b16 %v301
        %v889 = vunpack.c.l.b16 %v302
        %v890 = vunpack.c.l.b16 %v303
        %v891 = vunpack.c.l.b16 %v304
        %v892 = vunpack.c.l.b16 %v305
        %v893 = vunpack.c.l.b16 %v306
        %v894 = vunpack.c.l.b16 %v307
        %v895 = vunpack.c.l.b16 %v308
        %v896 = vunpack.c.l.b16 %v309
        %v897 = vunpack.c.l.b16 %v310
        %v898 = vpack.c.b16 %v883, %v882
        %v899 = vpack.c.b16 %v885, %v884
        %v900 = vpack.c.b16 %v887, %v886
        %v901 = vpack.c.b16 %v889, %v888
        %v902 = vpack.c.b16 %v891, %v890
        %v903 = vpack.c.b16 %v893, %v892
        %v904 = vpack.c.b16 %v895, %v894
        %v905 = vpack.c.b16 %v897, %v896
        %914 = vmatpush.bf16.xpose.msra.mxu0 %v905
        %915 = vmatpush.bf16.xpose.msra.mxu0 %v904
        %916 = vmatpush.bf16.xpose.msra.mxu0 %v903
        %917 = vmatpush.bf16.xpose.msra.mxu0 %v902
        %918 = vmatpush.bf16.xpose.msra.mxu0 %v901
        %919 = vmatpush.bf16.xpose.msra.mxu0 %v900
        %920 = vmatpush.bf16.xpose.msra.mxu0 %v899
        %921 = vmatpush.bf16.xpose.msra.mxu0 %v898
        %922 = vmatmul.bf16.gmra.mxu0 %v174
        %v923 = vpop.f32.mrf.mxu0
        %v924 = vadd.f32 0.0, %v923
        %v925 = vpop.f32.mrf.mxu0
        %926 = vdwg.mxu0
        %v943 = vunpack.c.l.b16 %v311
        %v944 = vunpack.c.l.b16 %v312
        %v945 = vunpack.c.l.b16 %v313
        %v946 = vunpack.c.l.b16 %v314
        %v947 = vunpack.c.l.b16 %v315
        %v948 = vunpack.c.l.b16 %v316
        %v949 = vunpack.c.l.b16 %v317
        %v950 = vunpack.c.l.b16 %v318
        %v951 = vunpack.c.l.b16 %v319
        %v952 = vunpack.c.l.b16 %v320
        %v953 = vunpack.c.l.b16 %v321
        %v954 = vunpack.c.l.b16 %v322
        %v955 = vunpack.c.l.b16 %v323
        %v956 = vunpack.c.l.b16 %v324
        %v957 = vunpack.c.l.b16 %v325
        %v958 = vunpack.c.l.b16 %v326
        %v959 = vpack.c.b16 %v944, %v943
        %v960 = vpack.c.b16 %v946, %v945
        %v961 = vpack.c.b16 %v948, %v947
        %v962 = vpack.c.b16 %v950, %v949
        %v963 = vpack.c.b16 %v952, %v951
        %v964 = vpack.c.b16 %v954, %v953
        %v965 = vpack.c.b16 %v956, %v955
        %v966 = vpack.c.b16 %v958, %v957
        %975 = vmatpush.bf16.xpose.msra.mxu0 %v966
        %976 = vmatpush.bf16.xpose.msra.mxu0 %v965
        %977 = vmatpush.bf16.xpose.msra.mxu0 %v964
        %978 = vmatpush.bf16.xpose.msra.mxu0 %v963
        %979 = vmatpush.bf16.xpose.msra.mxu0 %v962
        %980 = vmatpush.bf16.xpose.msra.mxu0 %v961
        %981 = vmatpush.bf16.xpose.msra.mxu0 %v960
        %982 = vmatpush.bf16.xpose.msra.mxu0 %v959
        %983 = vmatmul.bf16.gmra.mxu0 %v175
        %v984 = vpop.f32.mrf.mxu0
        %v985 = vadd.f32 0.0, %v984
        %v986 = vpop.f32.mrf.mxu0
        %987 = vdwg.mxu0
        %v1004 = vunpack.c.l.b16 %v327
        %v1005 = vunpack.c.l.b16 %v328
        %v1006 = vunpack.c.l.b16 %v329
        %v1007 = vunpack.c.l.b16 %v330
        %v1008 = vunpack.c.l.b16 %v331
        %v1009 = vunpack.c.l.b16 %v332
        %v1010 = vunpack.c.l.b16 %v333
        %v1011 = vunpack.c.l.b16 %v334
        %v1012 = vunpack.c.l.b16 %v335
        %v1013 = vunpack.c.l.b16 %v336
        %v1014 = vunpack.c.l.b16 %v337
        %v1015 = vunpack.c.l.b16 %v338
        %v1016 = vunpack.c.l.b16 %v339
        %v1017 = vunpack.c.l.b16 %v340
        %v1018 = vunpack.c.l.b16 %v341
        %v1019 = vunpack.c.l.b16 %v342
        %v1020 = vpack.c.b16 %v1005, %v1004
        %v1021 = vpack.c.b16 %v1007, %v1006
        %v1022 = vpack.c.b16 %v1009, %v1008
        %v1023 = vpack.c.b16 %v1011, %v1010
        %v1024 = vpack.c.b16 %v1013, %v1012
        %v1025 = vpack.c.b16 %v1015, %v1014
        %v1026 = vpack.c.b16 %v1017, %v1016
        %v1027 = vpack.c.b16 %v1019, %v1018
        %1036 = vmatpush.bf16.xpose.msra.mxu0 %v1027
        %1037 = vmatpush.bf16.xpose.msra.mxu0 %v1026
        %1038 = vmatpush.bf16.xpose.msra.mxu0 %v1025
        %1039 = vmatpush.bf16.xpose.msra.mxu0 %v1024
        %1040 = vmatpush.bf16.xpose.msra.mxu0 %v1023
        %1041 = vmatpush.bf16.xpose.msra.mxu0 %v1022
        %1042 = vmatpush.bf16.xpose.msra.mxu0 %v1021
        %1043 = vmatpush.bf16.xpose.msra.mxu0 %v1020
        %1044 = vmatmul.bf16.gmra.mxu0 %v176
        %v1045 = vpop.f32.mrf.mxu0
        %v1046 = vadd.f32 0.0, %v1045
        %v1047 = vpop.f32.mrf.mxu0
        %1048 = vdwg.mxu0
        %v1065 = vunpack.c.l.b16 %v343
        %v1066 = vunpack.c.l.b16 %v344
        %v1067 = vunpack.c.l.b16 %v345
        %v1068 = vunpack.c.l.b16 %v346
        %v1069 = vunpack.c.l.b16 %v347
        %v1070 = vunpack.c.l.b16 %v348
        %v1071 = vunpack.c.l.b16 %v349
        %v1072 = vunpack.c.l.b16 %v350
        %v1073 = vunpack.c.l.b16 %v351
        %v1074 = vunpack.c.l.b16 %v352
        %v1075 = vunpack.c.l.b16 %v353
        %v1076 = vunpack.c.l.b16 %v354
        %v1077 = vunpack.c.l.b16 %v355
        %v1078 = vunpack.c.l.b16 %v356
        %v1079 = vunpack.c.l.b16 %v357
        %v1080 = vunpack.c.l.b16 %v358
        %v1081 = vpack.c.b16 %v1066, %v1065
        %v1082 = vpack.c.b16 %v1068, %v1067
        %v1083 = vpack.c.b16 %v1070, %v1069
        %v1084 = vpack.c.b16 %v1072, %v1071
        %v1085 = vpack.c.b16 %v1074, %v1073
        %v1086 = vpack.c.b16 %v1076, %v1075
        %v1087 = vpack.c.b16 %v1078, %v1077
        %v1088 = vpack.c.b16 %v1080, %v1079
        %1097 = vmatpush.bf16.xpose.msra.mxu0 %v1088
        %1098 = vmatpush.bf16.xpose.msra.mxu0 %v1087
        %1099 = vmatpush.bf16.xpose.msra.mxu0 %v1086
        %1100 = vmatpush.bf16.xpose.msra.mxu0 %v1085
        %1101 = vmatpush.bf16.xpose.msra.mxu0 %v1084
        %1102 = vmatpush.bf16.xpose.msra.mxu0 %v1083
        %1103 = vmatpush.bf16.xpose.msra.mxu0 %v1082
        %1104 = vmatpush.bf16.xpose.msra.mxu0 %v1081
        %1105 = vmatmul.bf16.gmra.mxu0 %v177
        %v1106 = vpop.f32.mrf.mxu0
        %v1107 = vadd.f32 0.0, %v1106
        %v1108 = vpop.f32.mrf.mxu0
        %1109 = vdwg.mxu0
        %v1126 = vunpack.c.l.b16 %v359
        %v1127 = vunpack.c.l.b16 %v360
        %v1128 = vunpack.c.l.b16 %v361
        %v1129 = vunpack.c.l.b16 %v362
        %v1130 = vunpack.c.l.b16 %v363
        %v1131 = vunpack.c.l.b16 %v364
        %v1132 = vunpack.c.l.b16 %v365
        %v1133 = vunpack.c.l.b16 %v366
        %v1134 = vunpack.c.l.b16 %v367
        %v1135 = vunpack.c.l.b16 %v368
        %v1136 = vunpack.c.l.b16 %v369
        %v1137 = vunpack.c.l.b16 %v370
        %v1138 = vunpack.c.l.b16 %v371
        %v1139 = vunpack.c.l.b16 %v372
        %v1140 = vunpack.c.l.b16 %v373
        %v1141 = vunpack.c.l.b16 %v374
        %v1142 = vpack.c.b16 %v1127, %v1126
        %v1143 = vpack.c.b16 %v1129, %v1128
        %v1144 = vpack.c.b16 %v1131, %v1130
        %v1145 = vpack.c.b16 %v1133, %v1132
        %v1146 = vpack.c.b16 %v1135, %v1134
        %v1147 = vpack.c.b16 %v1137, %v1136
        %v1148 = vpack.c.b16 %v1139, %v1138
        %v1149 = vpack.c.b16 %v1141, %v1140
        %1158 = vmatpush.bf16.xpose.msra.mxu0 %v1149
        %1159 = vmatpush.bf16.xpose.msra.mxu0 %v1148
        %1160 = vmatpush.bf16.xpose.msra.mxu0 %v1147
        %1161 = vmatpush.bf16.xpose.msra.mxu0 %v1146
        %1162 = vmatpush.bf16.xpose.msra.mxu0 %v1145
        %1163 = vmatpush.bf16.xpose.msra.mxu0 %v1144
        %1164 = vmatpush.bf16.xpose.msra.mxu0 %v1143
        %1165 = vmatpush.bf16.xpose.msra.mxu0 %v1142
        %1166 = vmatmul.bf16.gmra.mxu0 %v178
        %v1167 = vpop.f32.mrf.mxu0
        %v1168 = vadd.f32 0.0, %v1167
        %v1169 = vpop.f32.mrf.mxu0
        %1170 = vdwg.mxu0
        %v1187 = vunpack.c.l.b16 %v375
        %v1188 = vunpack.c.l.b16 %v376
        %v1189 = vunpack.c.l.b16 %v377
        %v1190 = vunpack.c.l.b16 %v378
        %v1191 = vunpack.c.l.b16 %v379
        %v1192 = vunpack.c.l.b16 %v380
        %v1193 = vunpack.c.l.b16 %v381
        %v1194 = vunpack.c.l.b16 %v382
        %v1195 = vunpack.c.l.b16 %v383
        %v1196 = vunpack.c.l.b16 %v384
        %v1197 = vunpack.c.l.b16 %v385
        %v1198 = vunpack.c.l.b16 %v386
        %v1199 = vunpack.c.l.b16 %v387
        %v1200 = vunpack.c.l.b16 %v388
        %v1201 = vunpack.c.l.b16 %v389
        %v1202 = vunpack.c.l.b16 %v390
        %v1203 = vpack.c.b16 %v1188, %v1187
        %v1204 = vpack.c.b16 %v1190, %v1189
        %v1205 = vpack.c.b16 %v1192, %v1191
        %v1206 = vpack.c.b16 %v1194, %v1193
        %v1207 = vpack.c.b16 %v1196, %v1195
        %v1208 = vpack.c.b16 %v1198, %v1197
        %v1209 = vpack.c.b16 %v1200, %v1199
        %v1210 = vpack.c.b16 %v1202, %v1201
        %1219 = vmatpush.bf16.xpose.msra.mxu0 %v1210
        %1220 = vmatpush.bf16.xpose.msra.mxu0 %v1209
        %1221 = vmatpush.bf16.xpose.msra.mxu0 %v1208
        %1222 = vmatpush.bf16.xpose.msra.mxu0 %v1207
        %1223 = vmatpush.bf16.xpose.msra.mxu0 %v1206
        %1224 = vmatpush.bf16.xpose.msra.mxu0 %v1205
        %1225 = vmatpush.bf16.xpose.msra.mxu0 %v1204
        %1226 = vmatpush.bf16.xpose.msra.mxu0 %v1203
        %1227 = vmatmul.bf16.gmra.mxu0 %v179
        %v1228 = vpop.f32.mrf.mxu0
        %v1229 = vadd.f32 0.0, %v1228
        %v1230 = vpop.f32.mrf.mxu0
        %1231 = vdwg.mxu0
        %v1248 = vunpack.c.l.b16 %v391
        %v1249 = vunpack.c.l.b16 %v392
        %v1250 = vunpack.c.l.b16 %v393
        %v1251 = vunpack.c.l.b16 %v394
        %v1252 = vunpack.c.l.b16 %v395
        %v1253 = vunpack.c.l.b16 %v396
        %v1254 = vunpack.c.l.b16 %v397
        %v1255 = vunpack.c.l.b16 %v398
        %v1256 = vunpack.c.l.b16 %v399
        %v1257 = vunpack.c.l.b16 %v400
        %v1258 = vunpack.c.l.b16 %v401
        %v1259 = vunpack.c.l.b16 %v402
        %v1260 = vunpack.c.l.b16 %v403
        %v1261 = vunpack.c.l.b16 %v404
        %v1262 = vunpack.c.l.b16 %v405
        %v1263 = vunpack.c.l.b16 %v406
        %v1264 = vpack.c.b16 %v1249, %v1248
        %v1265 = vpack.c.b16 %v1251, %v1250
        %v1266 = vpack.c.b16 %v1253, %v1252
        %v1267 = vpack.c.b16 %v1255, %v1254
        %v1268 = vpack.c.b16 %v1257, %v1256
        %v1269 = vpack.c.b16 %v1259, %v1258
        %v1270 = vpack.c.b16 %v1261, %v1260
        %v1271 = vpack.c.b16 %v1263, %v1262
        %1280 = vmatpush.bf16.xpose.msra.mxu0 %v1271
        %1281 = vmatpush.bf16.xpose.msra.mxu0 %v1270
        %1282 = vmatpush.bf16.xpose.msra.mxu0 %v1269
        %1283 = vmatpush.bf16.xpose.msra.mxu0 %v1268
        %1284 = vmatpush.bf16.xpose.msra.mxu0 %v1267
        %1285 = vmatpush.bf16.xpose.msra.mxu0 %v1266
        %1286 = vmatpush.bf16.xpose.msra.mxu0 %v1265
        %1287 = vmatpush.bf16.xpose.msra.mxu0 %v1264
        %1288 = vmatmul.bf16.gmra.mxu0 %v180
        %v1289 = vpop.f32.mrf.mxu0
        %v1290 = vadd.f32 0.0, %v1289
        %v1291 = vpop.f32.mrf.mxu0
        %1292 = vdwg.mxu0
        %v1309 = vunpack.c.l.b16 %v407
        %v1310 = vunpack.c.l.b16 %v408
        %v1311 = vunpack.c.l.b16 %v409
        %v1312 = vunpack.c.l.b16 %v410
        %v1313 = vunpack.c.l.b16 %v411
        %v1314 = vunpack.c.l.b16 %v412
        %v1315 = vunpack.c.l.b16 %v413
        %v1316 = vunpack.c.l.b16 %v414
        %v1317 = vunpack.c.l.b16 %v415
        %v1318 = vunpack.c.l.b16 %v416
        %v1319 = vunpack.c.l.b16 %v417
        %v1320 = vunpack.c.l.b16 %v418
        %v1321 = vunpack.c.l.b16 %v419
        %v1322 = vunpack.c.l.b16 %v420
        %v1323 = vunpack.c.l.b16 %v421
        %v1324 = vunpack.c.l.b16 %v422
        %v1325 = vpack.c.b16 %v1310, %v1309
        %v1326 = vpack.c.b16 %v1312, %v1311
        %v1327 = vpack.c.b16 %v1314, %v1313
        %v1328 = vpack.c.b16 %v1316, %v1315
        %v1329 = vpack.c.b16 %v1318, %v1317
        %v1330 = vpack.c.b16 %v1320, %v1319
        %v1331 = vpack.c.b16 %v1322, %v1321
        %v1332 = vpack.c.b16 %v1324, %v1323
        %1341 = vmatpush.bf16.xpose.msra.mxu0 %v1332
        %1342 = vmatpush.bf16.xpose.msra.mxu0 %v1331
        %1343 = vmatpush.bf16.xpose.msra.mxu0 %v1330
        %1344 = vmatpush.bf16.xpose.msra.mxu0 %v1329
        %1345 = vmatpush.bf16.xpose.msra.mxu0 %v1328
        %1346 = vmatpush.bf16.xpose.msra.mxu0 %v1327
        %1347 = vmatpush.bf16.xpose.msra.mxu0 %v1326
        %1348 = vmatpush.bf16.xpose.msra.mxu0 %v1325
        %1349 = vmatmul.bf16.gmra.mxu0 %v181
        %v1350 = vpop.f32.mrf.mxu0
        %v1351 = vadd.f32 0.0, %v1350
        %v1352 = vpop.f32.mrf.mxu0
        %1353 = vdwg.mxu0
        %v1370 = vunpack.c.l.b16 %v423
        %v1371 = vunpack.c.l.b16 %v424
        %v1372 = vunpack.c.l.b16 %v425
        %v1373 = vunpack.c.l.b16 %v426
        %v1374 = vunpack.c.l.b16 %v427
        %v1375 = vunpack.c.l.b16 %v428
        %v1376 = vunpack.c.l.b16 %v429
        %v1377 = vunpack.c.l.b16 %v430
        %v1378 = vunpack.c.l.b16 %v431
        %v1379 = vunpack.c.l.b16 %v432
        %v1380 = vunpack.c.l.b16 %v433
        %v1381 = vunpack.c.l.b16 %v434
        %v1382 = vunpack.c.l.b16 %v435
        %v1383 = vunpack.c.l.b16 %v436
        %v1384 = vunpack.c.l.b16 %v437
        %v1385 = vunpack.c.l.b16 %v438
        %v1386 = vpack.c.b16 %v1371, %v1370
        %v1387 = vpack.c.b16 %v1373, %v1372
        %v1388 = vpack.c.b16 %v1375, %v1374
        %v1389 = vpack.c.b16 %v1377, %v1376
        %v1390 = vpack.c.b16 %v1379, %v1378
        %v1391 = vpack.c.b16 %v1381, %v1380
        %v1392 = vpack.c.b16 %v1383, %v1382
        %v1393 = vpack.c.b16 %v1385, %v1384
        %1402 = vmatpush.bf16.xpose.msra.mxu0 %v1393
        %1403 = vmatpush.bf16.xpose.msra.mxu0 %v1392
        %1404 = vmatpush.bf16.xpose.msra.mxu0 %v1391
        %1405 = vmatpush.bf16.xpose.msra.mxu0 %v1390
        %1406 = vmatpush.bf16.xpose.msra.mxu0 %v1389
        %1407 = vmatpush.bf16.xpose.msra.mxu0 %v1388
        %1408 = vmatpush.bf16.xpose.msra.mxu0 %v1387
        %1409 = vmatpush.bf16.xpose.msra.mxu0 %v1386
        %1410 = vmatmul.bf16.gmra.mxu0 %v182
        %v1411 = vpop.f32.mrf.mxu0
        %v1412 = vadd.f32 0.0, %v1411
        %v1413 = vpop.f32.mrf.mxu0
        %1414 = vdwg.mxu0
        %1415 = vst [vmem:[%s164] sm:$0x1] %v497
        %1416 = vst [vmem:[%s164 + $0x1] sm:$0x1] %v558
        %1417 = vst [vmem:[%s164 + $0x2] sm:$0x1] %v619
        %1418 = vst [vmem:[%s164 + $0x3] sm:$0x1] %v680
        %1419 = vst [vmem:[%s164 + $0x4] sm:$0x1] %v741
        %1420 = vst [vmem:[%s164 + $0x5] sm:$0x1] %v802
        %1421 = vst [vmem:[%s164 + $0x6] sm:$0x1] %v863
        %1422 = vst [vmem:[%s164 + $0x7] sm:$0x1] %v924
        %1423 = vst [vmem:[%s164 + $0x8] sm:$0x1] %v985
        %1424 = vst [vmem:[%s164 + $0x9] sm:$0x1] %v1046
        %1425 = vst [vmem:[%s164 + $0xa] sm:$0x1] %v1107
        %1426 = vst [vmem:[%s164 + $0xb] sm:$0x1] %v1168
        %1427 = vst [vmem:[%s164 + $0xc] sm:$0x1] %v1229
        %1428 = vst [vmem:[%s164 + $0xd] sm:$0x1] %v1290
        %1429 = vst [vmem:[%s164 + $0xe] sm:$0x1] %v1351
        %1430 = vst [vmem:[%s164 + $0xf] sm:$0x1] %v1412
        %s1431 = sand.u32 %s74, 1
        %s1432 = scalar_lea.sflag [#allocation4], %s1431
        %s1433 = sand.u32 %s74, 1
        %s1434 = smul.addr %s1433, 16
        %s1435 = scalar_lea.vmem [#allocation5], %s1434
        // Predicated region
        $region33: #{tpu_custom_call.1} parent=27 // pred_check
          %p1436 = pneg %p84
        $region34: #{tpu_custom_call.1} parent=27 // pred_check_branch
          %1438 = sbr.rel (%p1436) target = $region36
        $region35: #{tpu_custom_call.1} parent=27 // pred_region
          %s1439 = smul.u32 16, %s19
          %1441 = vsyncadd %s1432, 0
          %s1442 = scalar_lea.hbm %s2, %s1439
          %s1443 = sshll.u32 %s1435, 4
          %s1444 = int_to_ptr.vmem [resolvable:$true] %s1443
          %s1445 = sshll.u32 %s1442, 4
          %s1446 = int_to_ptr.hbm [resolvable:$true] %s1445
          %1451 = dma.vmem_to_hbm [thread:$0]  %s1444, 256, %s1446, %s1432, 16, 16, 1
        $region36: #{tpu_custom_call.1} parent=27 // pred_fallthru
          _
      $region28: #{tpu_custom_call.1} parent=5 // pred_fallthru
        _
      %p1452 = scmp.le.s32.totalorder 2, %s14
      // Predicated region
      $region37: #{tpu_custom_call.1} parent=5 // pred_check
        %p1453 = pneg %p1452
      $region38: #{tpu_custom_call.1} parent=5 // pred_check_branch
        %1455 = sbr.rel (%p1453) target = $region40
      $region39: #{tpu_custom_call.1} parent=5 // pred_region
        %s1456 = ssub.s32 %s14, 2
        // Predicated region
        $region41: #{tpu_custom_call.1} parent=39 // pred_check
          %p1457 = pneg %p90
        $region42: #{tpu_custom_call.1} parent=39 // pred_check_branch
          %1459 = sbr.rel (%p1457) target = $region44
        $region43: #{tpu_custom_call.1} parent=39 // pred_region
          %s1460 = sand.u32 %s75, 1
          %s1461 = scalar_lea.sflag [#allocation4], %s1460
          %s1462 = sand.u32 %s75, 1
          %s1463 = smul.addr %s1462, 16
          %s1464 = scalar_lea.vmem [#allocation5], %s1463
          %1466 = dma.done %s1461, 256
        $region44: #{tpu_custom_call.1} parent=39 // pred_fallthru
          _
      $region40: #{tpu_custom_call.1} parent=5 // pred_fallthru
        _
    $region6: #{tpu_custom_call.1} parent=1 // loop_footer
      %s18 = sadd.s32 1, %s14
    $region7: #{tpu_custom_call.1} parent=1 // loop_footer_branch
      %13 = sbr.rel target = $region3
    $region8: #{tpu_custom_call.1} parent=1 // loop_exit
      _
    %1467 = vsyncpa [#allocation3], 1
    %s1468 = scalar_lea.sflag [#allocation3], 1
    %1469 = vsyncpa %s1468, 1
    %1470 = vsyncpa [#allocation4], 1
    %s1471 = scalar_lea.sflag [#allocation4], 1
    %1472 = vsyncpa %s1471, 1

</llo_original>
